<compile_context>
chip_gen: v5e
topology: v5e:2x2
jax: 0.10.0
libtpu: 0.0.40
codegen_flags: <defaults>
</compile_context>

<pallas_src>
import functools

import numpy as np

import jax
import jax.numpy as jnp
from jax.experimental import pallas as pl
from jax.experimental.pallas import tpu as pltpu


def _round_up(v: int, m: int) -> int:
    return ((v + m - 1) // m) * m


def _maxpool_plane_kernel(x_ref, selh_ref, selw_ref, o_ref, *, K: int):
    """Max-pool TP full (H, W) planes into (TP, Ho, Wo).

    selh[a, i, i*K + a] = 1  selects input row  i*K + a  for output row i.
    selw[b, j*K + b, j] = 1  selects input col  j*K + b  for output col j.
    Window max = max over a of (selh[a] @ x), then max over b of (. @ selw[b]).
    Only full-block ref loads/stores, 2-D matmuls, element-wise max, and a
    leading-axis stack are used (all well-supported Mosaic ops).
    """
    TP = x_ref.shape[0]
    selh = selh_ref[...]          # (K, Ho, H) float32
    selw = selw_ref[...]          # (K, W, Wo) float32
    x = x_ref[...]                # (TP, H, W)

    outs = []
    for p in range(TP):           # TP is small and static -> fully unrolled
        xp = x[p].astype(jnp.float32)                          # (H, W)
        # Height reduction: max over the K row taps of each window.
        r = jnp.dot(selh[0], xp, preferred_element_type=jnp.float32)
        for a in range(1, K):
            r = jnp.maximum(
                r, jnp.dot(selh[a], xp, preferred_element_type=jnp.float32))
        # Width reduction: max over the K column taps of each window.
        o = jnp.dot(r, selw[0], preferred_element_type=jnp.float32)
        for b in range(1, K):
            o = jnp.maximum(
                o, jnp.dot(r, selw[b], preferred_element_type=jnp.float32))
        outs.append(o)                                         # (Ho, Wo)

    o_ref[...] = jnp.stack(outs, axis=0).astype(o_ref.dtype)   # one dense store


@functools.partial(jax.jit, static_argnames=("kernel_size",))
def maxpool2d_pallas(x_nchw: jax.Array, kernel_size: int = 3) -> jax.Array:
    """torch.nn.MaxPool2d(kernel_size, ceil_mode=False) on NCHW input."""
    K = kernel_size
    S = kernel_size                      # PyTorch default: stride = kernel_size
    N, C, H, W = x_nchw.shape
    Ho = (H - K) // S + 1                # floor mode (ceil_mode=False)
    Wo = (W - K) // S + 1
    if Ho <= 0 or Wo <= 0:
        raise ValueError("input spatial dims smaller than the pooling window")

    dtype = x_nchw.dtype
    itemsize = jnp.dtype(dtype).itemsize

    # Padded VMEM footprint of one (H, W) plane: H on sublanes, W on lanes.
    sublane = 8 * max(1, 4 // itemsize)              # 8 (f32) / 16 (bf16) / 32 (i8)
    padded_plane = _round_up(H, sublane) * _round_up(W, 128) * itemsize

    # Pathologically large single plane: the double-buffered block would blow
    # the scoped-VMEM budget -> use XLA's fused reduce_window instead.
    if padded_plane > 12 * 1024 * 1024:
        init = (-jnp.inf if jnp.issubdtype(dtype, jnp.floating)
                else jnp.iinfo(dtype).min)
        return jax.lax.reduce_window(
            x_nchw, jnp.asarray(init, dtype), jax.lax.max,
            (1, 1, K, K), (1, 1, S, S), "VALID")

    P = N * C
    x_planes = x_nchw.reshape(P, H, W)   # free reshape (NCHW is contiguous)

    # Plane tile: (a) <= ~6 MiB *padded* per input block so the double-buffered
    # pipeline fits every generation's scoped VMEM, (b) short unrolled per-plane
    # loop, (c) >= 2 grid steps when possible so both v7x TensorCores get work.
    budget_planes = max(1, (6 * 1024 * 1024) // max(1, padded_plane))
    TP = min(P, 16, budget_planes)
    if P >= 2:
        TP = min(TP, -(-P // 2))
    TP = max(TP, 1)
    grid = (pl.cdiv(P, TP),)
    # Note: the last grid step may contain up to TP-1 padded planes whose
    # results are discarded on writeback -- at most one tile of waste per call.

    # Constant 0/1 tap-selection matrices (built at trace time, tiny).
    selh = np.zeros((K, Ho, H), np.float32)
    selw = np.zeros((K, W, Wo), np.float32)
    rows = np.arange(Ho)
    cols = np.arange(Wo)
    for a in range(K):
        selh[a, rows, rows * S + a] = 1.0
    for b in range(K):
        selw[b, cols * S + b, cols] = 1.0

    out_planes = pl.pallas_call(
        functools.partial(_maxpool_plane_kernel, K=K),
        out_shape=jax.ShapeDtypeStruct((P, Ho, Wo), dtype),
        grid=grid,
        in_specs=[
            pl.BlockSpec((TP, H, W), lambda i: (i, 0, 0)),
            # Selection matrices: same block every step -> fetched once, resident.
            pl.BlockSpec((K, Ho, H), lambda i: (0, 0, 0)),
            pl.BlockSpec((K, W, Wo), lambda i: (0, 0, 0)),
        ],
        out_specs=pl.BlockSpec((TP, Ho, Wo), lambda i: (i, 0, 0)),
        compiler_params=pltpu.CompilerParams(
            dimension_semantics=("parallel",),
            vmem_limit_bytes=32 * 1024 * 1024,
        ),
        cost_estimate=pl.CostEstimate(
            flops=K * K * P * Ho * Wo,
            transcendentals=0,
            bytes_accessed=(P * H * W + P * Ho * Wo) * itemsize,
        ),
    )(x_planes, jnp.asarray(selh), jnp.asarray(selw))

    return out_planes.reshape(N, C, Ho, Wo)   # free reshape back to NCHW


class Net:
    """JAX/Pallas counterpart of the PyTorch `Net` module (no parameters)."""

    def __init__(self):
        self.kernel_size = 3

    def __call__(self, x_nchw: jax.Array) -> jax.Array:
        return maxpool2d_pallas(x_nchw, kernel_size=self.kernel_size)


def _reference_maxpool(x_nchw: jax.Array, K: int = 3) -> jax.Array:
    # Pure-JAX reference (lax.reduce_window) for a correctness sanity check.
    return jax.lax.reduce_window(
        x_nchw,
        -jnp.inf,
        jax.lax.max,
        window_dimensions=(1, 1, K, K),
        window_strides=(1, 1, K, K),
        padding="VALID",
    )


if __name__ == "__main__":
    key = jax.random.PRNGKey(0)
    # Small NCHW input consistent with the module's forward (conv-style input).
    x = jax.random.normal(key, (2, 4, 16, 16), dtype=jnp.float32)

    net = Net()
    out = jax.block_until_ready(net(x))

    assert out.shape == (2, 4, 5, 5), out.shape
    ref = _reference_maxpool(x, K=3)
    assert jnp.allclose(out, ref), "Pallas maxpool mismatch vs reference"

    print("KERNEL_OK")
</pallas_src>

<mosaic_0001>
module attributes {stable_mosaic.version = 11 : i64} {
  func.func @_maxpool_plane_kernel(%arg0: i32, %arg1: memref<4x16x16xf32, #tpu.memory_space<vmem>>, %arg2: memref<3x5x16xf32, #tpu.memory_space<vmem>>, %arg3: memref<3x16x5xf32, #tpu.memory_space<vmem>>, %arg4: memref<4x5x5xf32, #tpu.memory_space<vmem>>) attributes {dimension_semantics = [#tpu.dimension_semantics<parallel>], iteration_bounds = array<i64: 2>, scalar_prefetch = 0 : i64, scratch_operands = 0 : i64, tpu.core_type = #tpu.core_type<tc>, window_params = [{transform_indices = @transform_0, window_bounds = array<i64: 4, 16, 16>}, {pipeline_mode = #tpu.pipeline_mode<synchronous>, transform_indices = @transform_1, window_bounds = array<i64: 3, 5, 16>}, {pipeline_mode = #tpu.pipeline_mode<synchronous>, transform_indices = @transform_2, window_bounds = array<i64: 3, 16, 5>}, {transform_indices = @transform_3, window_bounds = array<i64: 4, 5, 5>}]} {
    %c0 = arith.constant 0 : index
    %c0_0 = arith.constant 0 : index
    %c0_1 = arith.constant 0 : index
    %0 = vector.load %arg2[%c0, %c0_0, %c0_1] : memref<3x5x16xf32, #tpu.memory_space<vmem>>, vector<3x5x16xf32>
    %c0_2 = arith.constant 0 : index
    %c0_3 = arith.constant 0 : index
    %c0_4 = arith.constant 0 : index
    %1 = vector.load %arg3[%c0_2, %c0_3, %c0_4] : memref<3x16x5xf32, #tpu.memory_space<vmem>>, vector<3x16x5xf32>
    %c0_5 = arith.constant 0 : index
    %c0_6 = arith.constant 0 : index
    %c0_7 = arith.constant 0 : index
    %2 = vector.load %arg1[%c0_5, %c0_6, %c0_7] : memref<4x16x16xf32, #tpu.memory_space<vmem>>, vector<4x16x16xf32>
    %3 = vector.extract_strided_slice %2 {offsets = [0, 0, 0], sizes = [1, 16, 16], strides = [1, 1, 1]} : vector<4x16x16xf32> to vector<1x16x16xf32>
    %4 = vector.shape_cast %3 : vector<1x16x16xf32> to vector<16x16xf32>
    %5 = vector.extract_strided_slice %0 {offsets = [0, 0, 0], sizes = [1, 5, 16], strides = [1, 1, 1]} : vector<3x5x16xf32> to vector<1x5x16xf32>
    %6 = vector.shape_cast %5 : vector<1x5x16xf32> to vector<5x16xf32>
    %cst = arith.constant dense<0.000000e+00> : vector<5x16xf32>
    %7 = tpu.matmul %6, %4, %cst {dimension_numbers = #tpu.dot_dimension_numbers<[1], [0], [0], [1], [0, 0, 1, 1], [], []>} : vector<5x16xf32>, vector<16x16xf32>, vector<5x16xf32> -> vector<5x16xf32>
    %8 = vector.extract_strided_slice %0 {offsets = [1, 0, 0], sizes = [1, 5, 16], strides = [1, 1, 1]} : vector<3x5x16xf32> to vector<1x5x16xf32>
    %9 = vector.shape_cast %8 : vector<1x5x16xf32> to vector<5x16xf32>
    %cst_8 = arith.constant dense<0.000000e+00> : vector<5x16xf32>
    %10 = tpu.matmul %9, %4, %cst_8 {dimension_numbers = #tpu.dot_dimension_numbers<[1], [0], [0], [1], [0, 0, 1, 1], [], []>} : vector<5x16xf32>, vector<16x16xf32>, vector<5x16xf32> -> vector<5x16xf32>
    %11 = arith.maximumf %7, %10 : vector<5x16xf32>
    %12 = vector.extract_strided_slice %0 {offsets = [2, 0, 0], sizes = [1, 5, 16], strides = [1, 1, 1]} : vector<3x5x16xf32> to vector<1x5x16xf32>
    %13 = vector.shape_cast %12 : vector<1x5x16xf32> to vector<5x16xf32>
    %cst_9 = arith.constant dense<0.000000e+00> : vector<5x16xf32>
    %14 = tpu.matmul %13, %4, %cst_9 {dimension_numbers = #tpu.dot_dimension_numbers<[1], [0], [0], [1], [0, 0, 1, 1], [], []>} : vector<5x16xf32>, vector<16x16xf32>, vector<5x16xf32> -> vector<5x16xf32>
    %15 = arith.maximumf %11, %14 : vector<5x16xf32>
    %16 = vector.extract_strided_slice %1 {offsets = [0, 0, 0], sizes = [1, 16, 5], strides = [1, 1, 1]} : vector<3x16x5xf32> to vector<1x16x5xf32>
    %17 = vector.shape_cast %16 : vector<1x16x5xf32> to vector<16x5xf32>
    %cst_10 = arith.constant dense<0.000000e+00> : vector<5x5xf32>
    %18 = tpu.matmul %15, %17, %cst_10 {dimension_numbers = #tpu.dot_dimension_numbers<[1], [0], [0], [1], [0, 0, 1, 1], [], []>} : vector<5x16xf32>, vector<16x5xf32>, vector<5x5xf32> -> vector<5x5xf32>
    %19 = vector.extract_strided_slice %1 {offsets = [1, 0, 0], sizes = [1, 16, 5], strides = [1, 1, 1]} : vector<3x16x5xf32> to vector<1x16x5xf32>
    %20 = vector.shape_cast %19 : vector<1x16x5xf32> to vector<16x5xf32>
    %cst_11 = arith.constant dense<0.000000e+00> : vector<5x5xf32>
    %21 = tpu.matmul %15, %20, %cst_11 {dimension_numbers = #tpu.dot_dimension_numbers<[1], [0], [0], [1], [0, 0, 1, 1], [], []>} : vector<5x16xf32>, vector<16x5xf32>, vector<5x5xf32> -> vector<5x5xf32>
    %22 = arith.maximumf %18, %21 : vector<5x5xf32>
    %23 = vector.extract_strided_slice %1 {offsets = [2, 0, 0], sizes = [1, 16, 5], strides = [1, 1, 1]} : vector<3x16x5xf32> to vector<1x16x5xf32>
    %24 = vector.shape_cast %23 : vector<1x16x5xf32> to vector<16x5xf32>
    %cst_12 = arith.constant dense<0.000000e+00> : vector<5x5xf32>
    %25 = tpu.matmul %15, %24, %cst_12 {dimension_numbers = #tpu.dot_dimension_numbers<[1], [0], [0], [1], [0, 0, 1, 1], [], []>} : vector<5x16xf32>, vector<16x5xf32>, vector<5x5xf32> -> vector<5x5xf32>
    %26 = arith.maximumf %22, %25 : vector<5x5xf32>
    %27 = vector.extract_strided_slice %2 {offsets = [1, 0, 0], sizes = [1, 16, 16], strides = [1, 1, 1]} : vector<4x16x16xf32> to vector<1x16x16xf32>
    %28 = vector.shape_cast %27 : vector<1x16x16xf32> to vector<16x16xf32>
    %29 = vector.extract_strided_slice %0 {offsets = [0, 0, 0], sizes = [1, 5, 16], strides = [1, 1, 1]} : vector<3x5x16xf32> to vector<1x5x16xf32>
    %30 = vector.shape_cast %29 : vector<1x5x16xf32> to vector<5x16xf32>
    %cst_13 = arith.constant dense<0.000000e+00> : vector<5x16xf32>
    %31 = tpu.matmul %30, %28, %cst_13 {dimension_numbers = #tpu.dot_dimension_numbers<[1], [0], [0], [1], [0, 0, 1, 1], [], []>} : vector<5x16xf32>, vector<16x16xf32>, vector<5x16xf32> -> vector<5x16xf32>
    %32 = vector.extract_strided_slice %0 {offsets = [1, 0, 0], sizes = [1, 5, 16], strides = [1, 1, 1]} : vector<3x5x16xf32> to vector<1x5x16xf32>
    %33 = vector.shape_cast %32 : vector<1x5x16xf32> to vector<5x16xf32>
    %cst_14 = arith.constant dense<0.000000e+00> : vector<5x16xf32>
    %34 = tpu.matmul %33, %28, %cst_14 {dimension_numbers = #tpu.dot_dimension_numbers<[1], [0], [0], [1], [0, 0, 1, 1], [], []>} : vector<5x16xf32>, vector<16x16xf32>, vector<5x16xf32> -> vector<5x16xf32>
    %35 = arith.maximumf %31, %34 : vector<5x16xf32>
    %36 = vector.extract_strided_slice %0 {offsets = [2, 0, 0], sizes = [1, 5, 16], strides = [1, 1, 1]} : vector<3x5x16xf32> to vector<1x5x16xf32>
    %37 = vector.shape_cast %36 : vector<1x5x16xf32> to vector<5x16xf32>
    %cst_15 = arith.constant dense<0.000000e+00> : vector<5x16xf32>
    %38 = tpu.matmul %37, %28, %cst_15 {dimension_numbers = #tpu.dot_dimension_numbers<[1], [0], [0], [1], [0, 0, 1, 1], [], []>} : vector<5x16xf32>, vector<16x16xf32>, vector<5x16xf32> -> vector<5x16xf32>
    %39 = arith.maximumf %35, %38 : vector<5x16xf32>
    %40 = vector.extract_strided_slice %1 {offsets = [0, 0, 0], sizes = [1, 16, 5], strides = [1, 1, 1]} : vector<3x16x5xf32> to vector<1x16x5xf32>
    %41 = vector.shape_cast %40 : vector<1x16x5xf32> to vector<16x5xf32>
    %cst_16 = arith.constant dense<0.000000e+00> : vector<5x5xf32>
    %42 = tpu.matmul %39, %41, %cst_16 {dimension_numbers = #tpu.dot_dimension_numbers<[1], [0], [0], [1], [0, 0, 1, 1], [], []>} : vector<5x16xf32>, vector<16x5xf32>, vector<5x5xf32> -> vector<5x5xf32>
    %43 = vector.extract_strided_slice %1 {offsets = [1, 0, 0], sizes = [1, 16, 5], strides = [1, 1, 1]} : vector<3x16x5xf32> to vector<1x16x5xf32>
    %44 = vector.shape_cast %43 : vector<1x16x5xf32> to vector<16x5xf32>
    %cst_17 = arith.constant dense<0.000000e+00> : vector<5x5xf32>
    %45 = tpu.matmul %39, %44, %cst_17 {dimension_numbers = #tpu.dot_dimension_numbers<[1], [0], [0], [1], [0, 0, 1, 1], [], []>} : vector<5x16xf32>, vector<16x5xf32>, vector<5x5xf32> -> vector<5x5xf32>
    %46 = arith.maximumf %42, %45 : vector<5x5xf32>
    %47 = vector.extract_strided_slice %1 {offsets = [2, 0, 0], sizes = [1, 16, 5], strides = [1, 1, 1]} : vector<3x16x5xf32> to vector<1x16x5xf32>
    %48 = vector.shape_cast %47 : vector<1x16x5xf32> to vector<16x5xf32>
    %cst_18 = arith.constant dense<0.000000e+00> : vector<5x5xf32>
    %49 = tpu.matmul %39, %48, %cst_18 {dimension_numbers = #tpu.dot_dimension_numbers<[1], [0], [0], [1], [0, 0, 1, 1], [], []>} : vector<5x16xf32>, vector<16x5xf32>, vector<5x5xf32> -> vector<5x5xf32>
    %50 = arith.maximumf %46, %49 : vector<5x5xf32>
    %51 = vector.extract_strided_slice %2 {offsets = [2, 0, 0], sizes = [1, 16, 16], strides = [1, 1, 1]} : vector<4x16x16xf32> to vector<1x16x16xf32>
    %52 = vector.shape_cast %51 : vector<1x16x16xf32> to vector<16x16xf32>
    %53 = vector.extract_strided_slice %0 {offsets = [0, 0, 0], sizes = [1, 5, 16], strides = [1, 1, 1]} : vector<3x5x16xf32> to vector<1x5x16xf32>
    %54 = vector.shape_cast %53 : vector<1x5x16xf32> to vector<5x16xf32>
    %cst_19 = arith.constant dense<0.000000e+00> : vector<5x16xf32>
    %55 = tpu.matmul %54, %52, %cst_19 {dimension_numbers = #tpu.dot_dimension_numbers<[1], [0], [0], [1], [0, 0, 1, 1], [], []>} : vector<5x16xf32>, vector<16x16xf32>, vector<5x16xf32> -> vector<5x16xf32>
    %56 = vector.extract_strided_slice %0 {offsets = [1, 0, 0], sizes = [1, 5, 16], strides = [1, 1, 1]} : vector<3x5x16xf32> to vector<1x5x16xf32>
    %57 = vector.shape_cast %56 : vector<1x5x16xf32> to vector<5x16xf32>
    %cst_20 = arith.constant dense<0.000000e+00> : vector<5x16xf32>
    %58 = tpu.matmul %57, %52, %cst_20 {dimension_numbers = #tpu.dot_dimension_numbers<[1], [0], [0], [1], [0, 0, 1, 1], [], []>} : vector<5x16xf32>, vector<16x16xf32>, vector<5x16xf32> -> vector<5x16xf32>
    %59 = arith.maximumf %55, %58 : vector<5x16xf32>
    %60 = vector.extract_strided_slice %0 {offsets = [2, 0, 0], sizes = [1, 5, 16], strides = [1, 1, 1]} : vector<3x5x16xf32> to vector<1x5x16xf32>
    %61 = vector.shape_cast %60 : vector<1x5x16xf32> to vector<5x16xf32>
    %cst_21 = arith.constant dense<0.000000e+00> : vector<5x16xf32>
    %62 = tpu.matmul %61, %52, %cst_21 {dimension_numbers = #tpu.dot_dimension_numbers<[1], [0], [0], [1], [0, 0, 1, 1], [], []>} : vector<5x16xf32>, vector<16x16xf32>, vector<5x16xf32> -> vector<5x16xf32>
    %63 = arith.maximumf %59, %62 : vector<5x16xf32>
    %64 = vector.extract_strided_slice %1 {offsets = [0, 0, 0], sizes = [1, 16, 5], strides = [1, 1, 1]} : vector<3x16x5xf32> to vector<1x16x5xf32>
    %65 = vector.shape_cast %64 : vector<1x16x5xf32> to vector<16x5xf32>
    %cst_22 = arith.constant dense<0.000000e+00> : vector<5x5xf32>
    %66 = tpu.matmul %63, %65, %cst_22 {dimension_numbers = #tpu.dot_dimension_numbers<[1], [0], [0], [1], [0, 0, 1, 1], [], []>} : vector<5x16xf32>, vector<16x5xf32>, vector<5x5xf32> -> vector<5x5xf32>
    %67 = vector.extract_strided_slice %1 {offsets = [1, 0, 0], sizes = [1, 16, 5], strides = [1, 1, 1]} : vector<3x16x5xf32> to vector<1x16x5xf32>
    %68 = vector.shape_cast %67 : vector<1x16x5xf32> to vector<16x5xf32>
    %cst_23 = arith.constant dense<0.000000e+00> : vector<5x5xf32>
    %69 = tpu.matmul %63, %68, %cst_23 {dimension_numbers = #tpu.dot_dimension_numbers<[1], [0], [0], [1], [0, 0, 1, 1], [], []>} : vector<5x16xf32>, vector<16x5xf32>, vector<5x5xf32> -> vector<5x5xf32>
    %70 = arith.maximumf %66, %69 : vector<5x5xf32>
    %71 = vector.extract_strided_slice %1 {offsets = [2, 0, 0], sizes = [1, 16, 5], strides = [1, 1, 1]} : vector<3x16x5xf32> to vector<1x16x5xf32>
    %72 = vector.shape_cast %71 : vector<1x16x5xf32> to vector<16x5xf32>
    %cst_24 = arith.constant dense<0.000000e+00> : vector<5x5xf32>
    %73 = tpu.matmul %63, %72, %cst_24 {dimension_numbers = #tpu.dot_dimension_numbers<[1], [0], [0], [1], [0, 0, 1, 1], [], []>} : vector<5x16xf32>, vector<16x5xf32>, vector<5x5xf32> -> vector<5x5xf32>
    %74 = arith.maximumf %70, %73 : vector<5x5xf32>
    %75 = vector.extract_strided_slice %2 {offsets = [3, 0, 0], sizes = [1, 16, 16], strides = [1, 1, 1]} : vector<4x16x16xf32> to vector<1x16x16xf32>
    %76 = vector.shape_cast %75 : vector<1x16x16xf32> to vector<16x16xf32>
    %77 = vector.extract_strided_slice %0 {offsets = [0, 0, 0], sizes = [1, 5, 16], strides = [1, 1, 1]} : vector<3x5x16xf32> to vector<1x5x16xf32>
    %78 = vector.shape_cast %77 : vector<1x5x16xf32> to vector<5x16xf32>
    %cst_25 = arith.constant dense<0.000000e+00> : vector<5x16xf32>
    %79 = tpu.matmul %78, %76, %cst_25 {dimension_numbers = #tpu.dot_dimension_numbers<[1], [0], [0], [1], [0, 0, 1, 1], [], []>} : vector<5x16xf32>, vector<16x16xf32>, vector<5x16xf32> -> vector<5x16xf32>
    %80 = vector.extract_strided_slice %0 {offsets = [1, 0, 0], sizes = [1, 5, 16], strides = [1, 1, 1]} : vector<3x5x16xf32> to vector<1x5x16xf32>
    %81 = vector.shape_cast %80 : vector<1x5x16xf32> to vector<5x16xf32>
    %cst_26 = arith.constant dense<0.000000e+00> : vector<5x16xf32>
    %82 = tpu.matmul %81, %76, %cst_26 {dimension_numbers = #tpu.dot_dimension_numbers<[1], [0], [0], [1], [0, 0, 1, 1], [], []>} : vector<5x16xf32>, vector<16x16xf32>, vector<5x16xf32> -> vector<5x16xf32>
    %83 = arith.maximumf %79, %82 : vector<5x16xf32>
    %84 = vector.extract_strided_slice %0 {offsets = [2, 0, 0], sizes = [1, 5, 16], strides = [1, 1, 1]} : vector<3x5x16xf32> to vector<1x5x16xf32>
    %85 = vector.shape_cast %84 : vector<1x5x16xf32> to vector<5x16xf32>
    %cst_27 = arith.constant dense<0.000000e+00> : vector<5x16xf32>
    %86 = tpu.matmul %85, %76, %cst_27 {dimension_numbers = #tpu.dot_dimension_numbers<[1], [0], [0], [1], [0, 0, 1, 1], [], []>} : vector<5x16xf32>, vector<16x16xf32>, vector<5x16xf32> -> vector<5x16xf32>
    %87 = arith.maximumf %83, %86 : vector<5x16xf32>
    %88 = vector.extract_strided_slice %1 {offsets = [0, 0, 0], sizes = [1, 16, 5], strides = [1, 1, 1]} : vector<3x16x5xf32> to vector<1x16x5xf32>
    %89 = vector.shape_cast %88 : vector<1x16x5xf32> to vector<16x5xf32>
    %cst_28 = arith.constant dense<0.000000e+00> : vector<5x5xf32>
    %90 = tpu.matmul %87, %89, %cst_28 {dimension_numbers = #tpu.dot_dimension_numbers<[1], [0], [0], [1], [0, 0, 1, 1], [], []>} : vector<5x16xf32>, vector<16x5xf32>, vector<5x5xf32> -> vector<5x5xf32>
    %91 = vector.extract_strided_slice %1 {offsets = [1, 0, 0], sizes = [1, 16, 5], strides = [1, 1, 1]} : vector<3x16x5xf32> to vector<1x16x5xf32>
    %92 = vector.shape_cast %91 : vector<1x16x5xf32> to vector<16x5xf32>
    %cst_29 = arith.constant dense<0.000000e+00> : vector<5x5xf32>
    %93 = tpu.matmul %87, %92, %cst_29 {dimension_numbers = #tpu.dot_dimension_numbers<[1], [0], [0], [1], [0, 0, 1, 1], [], []>} : vector<5x16xf32>, vector<16x5xf32>, vector<5x5xf32> -> vector<5x5xf32>
    %94 = arith.maximumf %90, %93 : vector<5x5xf32>
    %95 = vector.extract_strided_slice %1 {offsets = [2, 0, 0], sizes = [1, 16, 5], strides = [1, 1, 1]} : vector<3x16x5xf32> to vector<1x16x5xf32>
    %96 = vector.shape_cast %95 : vector<1x16x5xf32> to vector<16x5xf32>
    %cst_30 = arith.constant dense<0.000000e+00> : vector<5x5xf32>
    %97 = tpu.matmul %87, %96, %cst_30 {dimension_numbers = #tpu.dot_dimension_numbers<[1], [0], [0], [1], [0, 0, 1, 1], [], []>} : vector<5x16xf32>, vector<16x5xf32>, vector<5x5xf32> -> vector<5x5xf32>
    %98 = arith.maximumf %94, %97 : vector<5x5xf32>
    %99 = vector.shape_cast %26 : vector<5x5xf32> to vector<1x5x5xf32>
    %100 = vector.shape_cast %50 : vector<5x5xf32> to vector<1x5x5xf32>
    %101 = vector.shape_cast %74 : vector<5x5xf32> to vector<1x5x5xf32>
    %102 = vector.shape_cast %98 : vector<5x5xf32> to vector<1x5x5xf32>
    %103 = tpu.concatenate %99, %100, %101, %102 in 0 : vector<1x5x5xf32>, vector<1x5x5xf32>, vector<1x5x5xf32>, vector<1x5x5xf32> -> vector<4x5x5xf32>
    %c0_31 = arith.constant 0 : index
    %c0_32 = arith.constant 0 : index
    %c0_33 = arith.constant 0 : index
    %104 = vector.load %arg4[%c0_31, %c0_32, %c0_33] : memref<4x5x5xf32, #tpu.memory_space<vmem>>, vector<4x5x5xf32>
    tpu.vector_store %arg4[%c0_31, %c0_32, %c0_33], %103 {strides = array<i32>} : memref<4x5x5xf32, #tpu.memory_space<vmem>>, vector<4x5x5xf32>,
    return
  }
  func.func @transform_0(%arg0: i32) -> (i32, i32, i32) {
    %c0_i32 = arith.constant 0 : i32
    %c0_i32_0 = arith.constant 0 : i32
    %c0_i32_1 = arith.constant 0 : i32
    return %arg0, %c0_i32, %c0_i32_0 : i32, i32, i32
  }
  func.func @transform_1(%arg0: i32) -> (i32, i32, i32) {
    %c0_i32 = arith.constant 0 : i32
    %c0_i32_0 = arith.constant 0 : i32
    %c0_i32_1 = arith.constant 0 : i32
    %c0_i32_2 = arith.constant 0 : i32
    return %c0_i32, %c0_i32_0, %c0_i32_1 : i32, i32, i32
  }
  func.func @transform_2(%arg0: i32) -> (i32, i32, i32) {
    %c0_i32 = arith.constant 0 : i32
    %c0_i32_0 = arith.constant 0 : i32
    %c0_i32_1 = arith.constant 0 : i32
    %c0_i32_2 = arith.constant 0 : i32
    return %c0_i32, %c0_i32_0, %c0_i32_1 : i32, i32, i32
  }
  func.func @transform_3(%arg0: i32) -> (i32, i32, i32) {
    %c0_i32 = arith.constant 0 : i32
    %c0_i32_0 = arith.constant 0 : i32
    %c0_i32_1 = arith.constant 0 : i32
    return %arg0, %c0_i32, %c0_i32_0 : i32, i32, i32
  }
}

</mosaic_0001>

<llo_original>
// kernel: maxpool2d_pallas.1
$region0: #{maxpool2d_pallas.1}
  #allocation0 [shape = 'u32[]', space=smem, size = 0x4, offset = 0x4, fixed_abs, tag = 'smem constant byte address 0x4 - core index']
  #allocation1 [shape = 'u32[72,128]{1,0:T(1,128)}', space=vmem, size = 0x9000, scoped, tag = 'internal scratch']
  %s0 = inlined_call_operand.hbm [shape: f32[8,16,16], index: 0, kind: input, shape index: {}]
  %s1 = inlined_call_operand.hbm [shape: f32[3,5,16], index: 1, kind: input, shape index: {}]
  %s2 = inlined_call_operand.hbm [shape: f32[3,16,5], index: 2, kind: input, shape index: {}]
  %s3 = inlined_call_operand.vmem [shape: f32[8,5,5], index: 3, kind: output, shape index: {}]
  %s4 = sld [smem:[#allocation0]]
  $region57: #{maxpool2d_pallas.1} parent=0
    _
  %s6 = ssub.s32 1, %s4
  %s7 = scalar_select 0, %s6, %s4
  $region1: #{maxpool2d_pallas.1} parent=0
    #allocation2 [shape = 'u8[65536]{0}', space=vmem, size = 0x10000, scoped, tag = 'input window, operand 0']
    #allocation3 [shape = 's32[2]{0}', space=sflag, size = 0x8, scoped, tag = 'scoped memory for maxpool2d_pallas.1']
    #allocation4 [shape = 'u8[12288]{0}', space=vmem, size = 0x3000, scoped, tag = 'input window, operand 1, single buffered']
    #allocation5 [shape = 's32[1]{0}', space=sflag, size = 0x4, scoped, tag = 'scoped memory for maxpool2d_pallas.1']
    #allocation6 [shape = 'u8[24576]{0}', space=vmem, size = 0x6000, scoped, tag = 'input window, operand 2, single buffered']
    %8 = vsyncpa [#allocation3], 0
    %s9 = scalar_lea.sflag [#allocation3], 1
    %10 = vsyncpa %s9, 0
    %11 = vsyncpa [#allocation5], 0
    loop: start=0, step=1, limit=4
    $region2: #{maxpool2d_pallas.1} parent=1 // loop_pre_header
      _
    $region3: #{maxpool2d_pallas.1} parent=1 // loop_header
      %s13 = sphi 0, %s17
      %p14 = scmp.ge.s32.totalorder %s13, 4
      %s23 = sphi 0, %s25
      %s26 = sphi 0, %s23
      %s27 = sphi 0, %s26
      %s43 = sphi 0, %s27
      %s47 = sphi 0, %s47
      %s49 = sphi 0, %s47
      %s50 = sphi 0, %s49
      %s64 = sphi 0, %s50
      %s68 = sphi 0, %s68
      %s70 = sphi 0, %s68
      %s71 = sphi 0, %s70
      %s85 = sphi 0, %s71
      %s91 = sphi 0, %s93
      %s94 = sphi 0, %s91
      %s95 = sphi 0, %s94
      %s111 = sphi 0, %s95
    $region4: #{maxpool2d_pallas.1} parent=1 // loop_header_branch
      %16 = sbr.rel (%p14) target = $region8
    $region5: #{maxpool2d_pallas.1} parent=1 // loop_body
      %s18 = ssub.s32 %s13, 1
      %s19 = ssub.s32 %s13, 2
      %s20 = sadd.s32 %s13, 1
      %s21 = ssub.s32 %s13, %s20
      %p22 = scmp.eq.s32.totalorder %s21, 0
      %s24 = sadd.s32 %s23, 1
      %s25 = scalar_select %p22, %s23, %s24
      %p28 = pneg %p22
      %p29 = scmp.eq.s32.totalorder %s13, 1
      %p30 = por %p28, %p29
      %p31 = scmp.ne.s32.totalorder %s23, %s26
      %p32 = scmp.eq.s32.totalorder %s13, 0
      %p33 = por %p31, %p32
      %p34 = scmp.ne.s32.totalorder %s23, %s26
      %p35 = scmp.eq.s32.totalorder %s18, 1
      %p36 = por %p34, %p35
      %p37 = scmp.ne.s32.totalorder %s26, %s27
      %p38 = scmp.eq.s32.totalorder %s18, 0
      %p39 = por %p37, %p38
      %p40 = scmp.ne.s32.totalorder %s26, %s27
      %p41 = scmp.eq.s32.totalorder %s19, 1
      %p42 = por %p40, %p41
      %p44 = scmp.ne.s32.totalorder %s27, %s43
      %p45 = scmp.eq.s32.totalorder %s19, 0
      %p46 = por %p44, %p45
      %s48 = sadd.s32 %s47, 1
      %p51 = scmp.eq.s32.totalorder %s13, 1
      %p52 = scmp.ne.s32.totalorder %s47, %s49
      %p53 = scmp.eq.s32.totalorder %s13, 0
      %p54 = por %p52, %p53
      %p55 = scmp.ne.s32.totalorder %s47, %s49
      %p56 = scmp.eq.s32.totalorder %s18, 1
      %p57 = por %p55, %p56
      %p58 = scmp.ne.s32.totalorder %s49, %s50
      %p59 = scmp.eq.s32.totalorder %s18, 0
      %p60 = por %p58, %p59
      %p61 = scmp.ne.s32.totalorder %s49, %s50
      %p62 = scmp.eq.s32.totalorder %s19, 1
      %p63 = por %p61, %p62
      %p65 = scmp.ne.s32.totalorder %s50, %s64
      %p66 = scmp.eq.s32.totalorder %s19, 0
      %p67 = por %p65, %p66
      %s69 = sadd.s32 %s68, 1
      %p72 = scmp.eq.s32.totalorder %s13, 1
      %p73 = scmp.ne.s32.totalorder %s68, %s70
      %p74 = scmp.eq.s32.totalorder %s13, 0
      %p75 = por %p73, %p74
      %p76 = scmp.ne.s32.totalorder %s68, %s70
      %p77 = scmp.eq.s32.totalorder %s18, 1
      %p78 = por %p76, %p77
      %p79 = scmp.ne.s32.totalorder %s70, %s71
      %p80 = scmp.eq.s32.totalorder %s18, 0
      %p81 = por %p79, %p80
      %p82 = scmp.ne.s32.totalorder %s70, %s71
      %p83 = scmp.eq.s32.totalorder %s19, 1
      %p84 = por %p82, %p83
      %p86 = scmp.ne.s32.totalorder %s71, %s85
      %p87 = scmp.eq.s32.totalorder %s19, 0
      %p88 = por %p86, %p87
      %s89 = ssub.s32 %s13, %s20
      %p90 = scmp.eq.s32.totalorder %s89, 0
      %s92 = sadd.s32 %s91, 1
      %s93 = scalar_select %p90, %s91, %s92
      %p96 = pneg %p90
      %p97 = scmp.eq.s32.totalorder %s13, 1
      %p98 = por %p96, %p97
      %p99 = scmp.ne.s32.totalorder %s91, %s94
      %p100 = scmp.eq.s32.totalorder %s13, 0
      %p101 = por %p99, %p100
      %p102 = scmp.ne.s32.totalorder %s91, %s94
      %p103 = scmp.eq.s32.totalorder %s18, 1
      %p104 = por %p102, %p103
      %p105 = scmp.ne.s32.totalorder %s94, %s95
      %p106 = scmp.eq.s32.totalorder %s18, 0
      %p107 = por %p105, %p106
      %p108 = scmp.ne.s32.totalorder %s94, %s95
      %p109 = scmp.eq.s32.totalorder %s19, 1
      %p110 = por %p108, %p109
      %p112 = scmp.ne.s32.totalorder %s95, %s111
      %p113 = scmp.eq.s32.totalorder %s19, 0
      %p114 = por %p112, %p113
      %p115 = scmp.le.s32.totalorder 1, %s13
      %p116 = scmp.lt.s32.totalorder %s13, 3
      %p117 = pnand %p115, %p116
      %p118 = pneg %p117
      // Predicated region
      $region9: #{maxpool2d_pallas.1} parent=5 // pred_check
        _
      $region10: #{maxpool2d_pallas.1} parent=5 // pred_check_branch
        %120 = sbr.rel (%p117) target = $region12
      $region11: #{maxpool2d_pallas.1} parent=5 // pred_region
        %s121 = ssub.s32 %s13, 1
        // Predicated region
        $region13: #{maxpool2d_pallas.1} parent=11 // pred_check
          %p122 = pneg %p60
        $region14: #{maxpool2d_pallas.1} parent=11 // pred_check_branch
          %124 = sbr.rel (%p122) target = $region16
        $region15: #{maxpool2d_pallas.1} parent=11 // pred_region
          %126 = vsyncadd [#allocation5], 0
          %s127 = sshll.u32 %s1, 4
          %s128 = int_to_ptr.hbm [resolvable:$true] %s127
          %s129 = sshll.u32 [#allocation4], 4
          %s130 = int_to_ptr.vmem [resolvable:$true] %s129
          %135 = dma.hbm_to_vmem [thread:$0]  %s128, 384, %s130, [#allocation5], 128, 128, 8
        $region16: #{maxpool2d_pallas.1} parent=11 // pred_fallthru
          _
        // Predicated region
        $region17: #{maxpool2d_pallas.1} parent=11 // pred_check
          %p136 = pneg %p81
        $region18: #{maxpool2d_pallas.1} parent=11 // pred_check_branch
          %138 = sbr.rel (%p136) target = $region20
        $region19: #{maxpool2d_pallas.1} parent=11 // pred_region
          %140 = vsyncadd [#allocation5], 0
          %s141 = sshll.u32 %s2, 4
          %s142 = int_to_ptr.hbm [resolvable:$true] %s141
          %s143 = sshll.u32 [#allocation6], 4
          %s144 = int_to_ptr.vmem [resolvable:$true] %s143
          %149 = dma.hbm_to_vmem [thread:$0]  %s142, 768, %s144, [#allocation5], 128, 128, 8
        $region20: #{maxpool2d_pallas.1} parent=11 // pred_fallthru
          _
      $region12: #{maxpool2d_pallas.1} parent=5 // pred_fallthru
        _
      %p150 = scmp.lt.s32.totalorder %s13, 2
      // Predicated region
      $region21: #{maxpool2d_pallas.1} parent=5 // pred_check
        %p151 = pneg %p150
      $region22: #{maxpool2d_pallas.1} parent=5 // pred_check_branch
        %153 = sbr.rel (%p151) target = $region24
      $region23: #{maxpool2d_pallas.1} parent=5 // pred_region
        // Predicated region
        $region25: #{maxpool2d_pallas.1} parent=23 // pred_check
          %p154 = pneg %p33
        $region26: #{maxpool2d_pallas.1} parent=23 // pred_check_branch
          %156 = sbr.rel (%p154) target = $region28
        $region27: #{maxpool2d_pallas.1} parent=23 // pred_region
          %s157 = sand.u32 %s23, 1
          %s158 = scalar_lea.sflag [#allocation3], %s157
          %s159 = sand.u32 %s23, 1
          %s160 = smul.addr %s159, 64
          %s161 = scalar_lea.vmem [#allocation2], %s160
          %s162 = smul.u32 4, %s13
          %164 = vsyncadd %s158, 0
          %s165 = smul.addr %s162, 2
          %s166 = smul.addr %s165, 8
          %s167 = scalar_lea.hbm %s0, %s166
          %s168 = sshll.u32 %s167, 4
          %s169 = int_to_ptr.hbm [resolvable:$true] %s168
          %s170 = sshll.u32 %s161, 4
          %s171 = int_to_ptr.vmem [resolvable:$true] %s170
          %176 = dma.hbm_to_vmem [thread:$0]  %s169, 1024, %s171, %s158, 128, 128, 8
        $region28: #{maxpool2d_pallas.1} parent=23 // pred_fallthru
          _
      $region24: #{maxpool2d_pallas.1} parent=5 // pred_fallthru
        _
      %p177 = scmp.le.s32.totalorder 1, %s13
      %p178 = scmp.lt.s32.totalorder %s13, 3
      %p179 = pnand %p177, %p178
      %p180 = pneg %p179
      // Predicated region
      $region29: #{maxpool2d_pallas.1} parent=5 // pred_check
        _
      $region30: #{maxpool2d_pallas.1} parent=5 // pred_check_branch
        %182 = sbr.rel (%p179) target = $region32
      $region31: #{maxpool2d_pallas.1} parent=5 // pred_region
        %s183 = ssub.s32 %s13, 1
        %s184 = sand.u32 %s26, 1
        %s185 = scalar_lea.sflag [#allocation3], %s184
        %s186 = sand.u32 %s26, 1
        %s187 = smul.addr %s186, 64
        %s188 = scalar_lea.vmem [#allocation2], %s187
        // Predicated region
        $region33: #{maxpool2d_pallas.1} parent=31 // pred_check
          %p189 = pneg %p39
        $region34: #{maxpool2d_pallas.1} parent=31 // pred_check_branch
          %191 = sbr.rel (%p189) target = $region36
        $region35: #{maxpool2d_pallas.1} parent=31 // pred_region
          %193 = dma.done %s185, 1024
        $region36: #{maxpool2d_pallas.1} parent=31 // pred_fallthru
          _
        // Predicated region
        $region37: #{maxpool2d_pallas.1} parent=31 // pred_check
          %p194 = pneg %p60
        $region38: #{maxpool2d_pallas.1} parent=31 // pred_check_branch
          %196 = sbr.rel (%p194) target = $region40
        $region39: #{maxpool2d_pallas.1} parent=31 // pred_region
          %198 = dma.done [#allocation5], 384
        $region40: #{maxpool2d_pallas.1} parent=31 // pred_fallthru
          _
        // Predicated region
        $region41: #{maxpool2d_pallas.1} parent=31 // pred_check
          %p199 = pneg %p81
        $region42: #{maxpool2d_pallas.1} parent=31 // pred_check_branch
          %201 = sbr.rel (%p199) target = $region44
        $region43: #{maxpool2d_pallas.1} parent=31 // pred_region
          %203 = dma.done [#allocation5], 768
        $region44: #{maxpool2d_pallas.1} parent=31 // pred_fallthru
          _
        %s204 = sand.u32 %s26, 1
        %s205 = scalar_lea.sflag [#allocation3], %s204
        %s206 = sand.u32 %s26, 1
        %s207 = smul.addr %s206, 64
        %s208 = scalar_lea.vmem [#allocation2], %s207
        %p209 = pneg %p39
        %p210 = pneg %p36
        %p211 = pneg %p60
        %p212 = pneg %p57
        %p213 = pneg %p81
        %p214 = pneg %p78
        %p215 = pneg %p107
        %p216 = pneg %p104
        %s217 = smul.u32 4, %s18
        %p218 = scmp.lt.s32.totalorder %s217, 7
        %s219 = scalar_select %p218, %s217, 7
        %s220 = smul.addr %s219, 8
        %s221 = scalar_lea.vmem %s3, %s220
        %s222 = smul.u32 4, %s18
        %s223 = smul.u32 4, %s18
        %p224 = scmp.lt.s32.totalorder %s223, 7
        %s225 = scalar_select %p224, %s223, 7
        %s226 = smul.addr %s225, 8
        %s227 = scalar_lea.vmem %s3, %s226
        %s228 = smul.u32 4, %s18
        %v229 = vld [vmem:[#allocation4] sm:$0x1f]
        %v230 = vld [vmem:[#allocation4 + $0x8] sm:$0x1f]
        %v231 = vld [vmem:[#allocation4 + $0x10] sm:$0x1f]
        %v232 = vld [vmem:[#allocation6] sm:$0xff]
        %v233 = vld [vmem:[#allocation6 + $0x8] sm:$0xff]
        %v234 = vld [vmem:[#allocation6 + $0x10] sm:$0xff]
        %v235 = vld [vmem:[#allocation6 + $0x18] sm:$0xff]
        %v236 = vld [vmem:[#allocation6 + $0x20] sm:$0xff]
        %v237 = vld [vmem:[#allocation6 + $0x28] sm:$0xff]
        %v238 = vld [vmem:[%s188] sm:$0xff]
        %v239 = vld [vmem:[%s188 + $0x8] sm:$0xff]
        %v240 = vld [vmem:[%s188 + $0x10] sm:$0xff]
        %v241 = vld [vmem:[%s188 + $0x18] sm:$0xff]
        %v242 = vld [vmem:[%s188 + $0x20] sm:$0xff]
        %v243 = vld [vmem:[%s188 + $0x28] sm:$0xff]
        %v244 = vld [vmem:[%s188 + $0x30] sm:$0xff]
        %v245 = vld [vmem:[%s188 + $0x38] sm:$0xff]
        %vm246 = vcmask 130048
        %v248 = vsel %vm246, %v229, 0
        %250 = vmatpush.msra.mxu0 0.0
        %251 = vmatpush.msra.mxu0 0.0
        %252 = vmatpush.msra.mxu0 0.0
        %253 = vmatpush.msra.mxu0 0.0
        %254 = vmatpush.msra.mxu0 0.0
        %255 = vmatpush.msra.mxu0 0.0
        %256 = vmatpush.msra.mxu0 0.0
        %257 = vmatpush.msra.mxu0 0.0
        %258 = vmatpush.msra.mxu0 0.0
        %259 = vmatpush.msra.mxu0 0.0
        %260 = vmatpush.msra.mxu0 0.0
        %261 = vmatpush.msra.mxu0 0.0
        %262 = vmatpush.msra.mxu0 0.0
        %263 = vmatpush.msra.mxu0 0.0
        %264 = vmatpush.msra.mxu0 %v239
        %265 = vmatpush.msra.mxu0 %v238
        %266 = vmatmul.f32.gmra.mxu0 %v248
        %v267 = vpop.f32.mrf.mxu0
        %v268 = vadd.f32 0.0, %v267
        %269 = vdwg.mxu0
        %v271 = vsel %vm246, %v230, 0
        %273 = vmatpush.msra.mxu0 0.0
        %274 = vmatpush.msra.mxu0 0.0
        %275 = vmatpush.msra.mxu0 0.0
        %276 = vmatpush.msra.mxu0 0.0
        %277 = vmatpush.msra.mxu0 0.0
        %278 = vmatpush.msra.mxu0 0.0
        %279 = vmatpush.msra.mxu0 0.0
        %280 = vmatpush.msra.mxu0 0.0
        %281 = vmatpush.msra.mxu0 0.0
        %282 = vmatpush.msra.mxu0 0.0
        %283 = vmatpush.msra.mxu0 0.0
        %284 = vmatpush.msra.mxu0 0.0
        %285 = vmatpush.msra.mxu0 0.0
        %286 = vmatpush.msra.mxu0 0.0
        %287 = vmatpush.msra.mxu0 %v239
        %288 = vmatpush.msra.mxu0 %v238
        %289 = vmatmul.f32.gmra.mxu0 %v271
        %v290 = vpop.f32.mrf.mxu0
        %v291 = vadd.f32 0.0, %v290
        %292 = vdwg.mxu0
        %v293 = vmax.f32 %v268, %v291
        %v295 = vsel %vm246, %v231, 0
        %297 = vmatpush.msra.mxu0 0.0
        %298 = vmatpush.msra.mxu0 0.0
        %299 = vmatpush.msra.mxu0 0.0
        %300 = vmatpush.msra.mxu0 0.0
        %301 = vmatpush.msra.mxu0 0.0
        %302 = vmatpush.msra.mxu0 0.0
        %303 = vmatpush.msra.mxu0 0.0
        %304 = vmatpush.msra.mxu0 0.0
        %305 = vmatpush.msra.mxu0 0.0
        %306 = vmatpush.msra.mxu0 0.0
        %307 = vmatpush.msra.mxu0 0.0
        %308 = vmatpush.msra.mxu0 0.0
        %309 = vmatpush.msra.mxu0 0.0
        %310 = vmatpush.msra.mxu0 0.0
        %311 = vmatpush.msra.mxu0 %v239
        %312 = vmatpush.msra.mxu0 %v238
        %313 = vmatmul.f32.gmra.mxu0 %v295
        %v314 = vpop.f32.mrf.mxu0
        %v315 = vadd.f32 0.0, %v314
        %316 = vdwg.mxu0
        %v317 = vmax.f32 %v293, %v315
        %v319 = vsel %vm246, %v317, 0
        %321 = vmatpush.msra.mxu0 0.0
        %322 = vmatpush.msra.mxu0 0.0
        %323 = vmatpush.msra.mxu0 0.0
        %324 = vmatpush.msra.mxu0 0.0
        %325 = vmatpush.msra.mxu0 0.0
        %326 = vmatpush.msra.mxu0 0.0
        %327 = vmatpush.msra.mxu0 0.0
        %328 = vmatpush.msra.mxu0 0.0
        %329 = vmatpush.msra.mxu0 0.0
        %330 = vmatpush.msra.mxu0 0.0
        %331 = vmatpush.msra.mxu0 0.0
        %332 = vmatpush.msra.mxu0 0.0
        %333 = vmatpush.msra.mxu0 0.0
        %334 = vmatpush.msra.mxu0 0.0
        %335 = vmatpush.msra.mxu0 %v233
        %336 = vmatpush.msra.mxu0 %v232
        %337 = vmatmul.f32.gmra.mxu0 %v319
        %v338 = vpop.f32.mrf.mxu0
        %v339 = vadd.f32 0.0, %v338
        %340 = vdwg.mxu0
        %341 = vmatpush.msra.mxu0 0.0
        %342 = vmatpush.msra.mxu0 0.0
        %343 = vmatpush.msra.mxu0 0.0
        %344 = vmatpush.msra.mxu0 0.0
        %345 = vmatpush.msra.mxu0 0.0
        %346 = vmatpush.msra.mxu0 0.0
        %347 = vmatpush.msra.mxu0 0.0
        %348 = vmatpush.msra.mxu0 0.0
        %349 = vmatpush.msra.mxu0 0.0
        %350 = vmatpush.msra.mxu0 0.0
        %351 = vmatpush.msra.mxu0 0.0
        %352 = vmatpush.msra.mxu0 0.0
        %353 = vmatpush.msra.mxu0 0.0
        %354 = vmatpush.msra.mxu0 0.0
        %355 = vmatpush.msra.mxu0 %v235
        %356 = vmatpush.msra.mxu0 %v234
        %357 = vmatmul.f32.gmra.mxu0 %v319
        %v358 = vpop.f32.mrf.mxu0
        %v359 = vadd.f32 0.0, %v358
        %360 = vdwg.mxu0
        %v361 = vmax.f32 %v339, %v359
        %362 = vmatpush.msra.mxu0 0.0
        %363 = vmatpush.msra.mxu0 0.0
        %364 = vmatpush.msra.mxu0 0.0
        %365 = vmatpush.msra.mxu0 0.0
        %366 = vmatpush.msra.mxu0 0.0
        %367 = vmatpush.msra.mxu0 0.0
        %368 = vmatpush.msra.mxu0 0.0
        %369 = vmatpush.msra.mxu0 0.0
        %370 = vmatpush.msra.mxu0 0.0
        %371 = vmatpush.msra.mxu0 0.0
        %372 = vmatpush.msra.mxu0 0.0
        %373 = vmatpush.msra.mxu0 0.0
        %374 = vmatpush.msra.mxu0 0.0
        %375 = vmatpush.msra.mxu0 0.0
        %376 = vmatpush.msra.mxu0 %v237
        %377 = vmatpush.msra.mxu0 %v236
        %378 = vmatmul.f32.gmra.mxu0 %v319
        %v379 = vpop.f32.mrf.mxu0
        %v380 = vadd.f32 0.0, %v379
        %381 = vdwg.mxu0
        %v382 = vmax.f32 %v361, %v380
        %383 = vmatpush.msra.mxu0 0.0
        %384 = vmatpush.msra.mxu0 0.0
        %385 = vmatpush.msra.mxu0 0.0
        %386 = vmatpush.msra.mxu0 0.0
        %387 = vmatpush.msra.mxu0 0.0
        %388 = vmatpush.msra.mxu0 0.0
        %389 = vmatpush.msra.mxu0 0.0
        %390 = vmatpush.msra.mxu0 0.0
        %391 = vmatpush.msra.mxu0 0.0
        %392 = vmatpush.msra.mxu0 0.0
        %393 = vmatpush.msra.mxu0 0.0
        %394 = vmatpush.msra.mxu0 0.0
        %395 = vmatpush.msra.mxu0 0.0
        %396 = vmatpush.msra.mxu0 0.0
        %397 = vmatpush.msra.mxu0 %v241
        %398 = vmatpush.msra.mxu0 %v240
        %399 = vmatmul.f32.gmra.mxu0 %v248
        %v400 = vpop.f32.mrf.mxu0
        %v401 = vadd.f32 0.0, %v400
        %402 = vdwg.mxu0
        %403 = vmatpush.msra.mxu0 0.0
        %404 = vmatpush.msra.mxu0 0.0
        %405 = vmatpush.msra.mxu0 0.0
        %406 = vmatpush.msra.mxu0 0.0
        %407 = vmatpush.msra.mxu0 0.0
        %408 = vmatpush.msra.mxu0 0.0
        %409 = vmatpush.msra.mxu0 0.0
        %410 = vmatpush.msra.mxu0 0.0
        %411 = vmatpush.msra.mxu0 0.0
        %412 = vmatpush.msra.mxu0 0.0
        %413 = vmatpush.msra.mxu0 0.0
        %414 = vmatpush.msra.mxu0 0.0
        %415 = vmatpush.msra.mxu0 0.0
        %416 = vmatpush.msra.mxu0 0.0
        %417 = vmatpush.msra.mxu0 %v241
        %418 = vmatpush.msra.mxu0 %v240
        %419 = vmatmul.f32.gmra.mxu0 %v271
        %v420 = vpop.f32.mrf.mxu0
        %v421 = vadd.f32 0.0, %v420
        %422 = vdwg.mxu0
        %v423 = vmax.f32 %v401, %v421
        %424 = vmatpush.msra.mxu0 0.0
        %425 = vmatpush.msra.mxu0 0.0
        %426 = vmatpush.msra.mxu0 0.0
        %427 = vmatpush.msra.mxu0 0.0
        %428 = vmatpush.msra.mxu0 0.0
        %429 = vmatpush.msra.mxu0 0.0
        %430 = vmatpush.msra.mxu0 0.0
        %431 = vmatpush.msra.mxu0 0.0
        %432 = vmatpush.msra.mxu0 0.0
        %433 = vmatpush.msra.mxu0 0.0
        %434 = vmatpush.msra.mxu0 0.0
        %435 = vmatpush.msra.mxu0 0.0
        %436 = vmatpush.msra.mxu0 0.0
        %437 = vmatpush.msra.mxu0 0.0
        %438 = vmatpush.msra.mxu0 %v241
        %439 = vmatpush.msra.mxu0 %v240
        %440 = vmatmul.f32.gmra.mxu0 %v295
        %v441 = vpop.f32.mrf.mxu0
        %v442 = vadd.f32 0.0, %v441
        %443 = vdwg.mxu0
        %v444 = vmax.f32 %v423, %v442
        %v446 = vsel %vm246, %v444, 0
        %448 = vmatpush.msra.mxu0 0.0
        %449 = vmatpush.msra.mxu0 0.0
        %450 = vmatpush.msra.mxu0 0.0
        %451 = vmatpush.msra.mxu0 0.0
        %452 = vmatpush.msra.mxu0 0.0
        %453 = vmatpush.msra.mxu0 0.0
        %454 = vmatpush.msra.mxu0 0.0
        %455 = vmatpush.msra.mxu0 0.0
        %456 = vmatpush.msra.mxu0 0.0
        %457 = vmatpush.msra.mxu0 0.0
        %458 = vmatpush.msra.mxu0 0.0
        %459 = vmatpush.msra.mxu0 0.0
        %460 = vmatpush.msra.mxu0 0.0
        %461 = vmatpush.msra.mxu0 0.0
        %462 = vmatpush.msra.mxu0 %v233
        %463 = vmatpush.msra.mxu0 %v232
        %464 = vmatmul.f32.gmra.mxu0 %v446
        %v465 = vpop.f32.mrf.mxu0
        %v466 = vadd.f32 0.0, %v465
        %467 = vdwg.mxu0
        %468 = vmatpush.msra.mxu0 0.0
        %469 = vmatpush.msra.mxu0 0.0
        %470 = vmatpush.msra.mxu0 0.0
        %471 = vmatpush.msra.mxu0 0.0
        %472 = vmatpush.msra.mxu0 0.0
        %473 = vmatpush.msra.mxu0 0.0
        %474 = vmatpush.msra.mxu0 0.0
        %475 = vmatpush.msra.mxu0 0.0
        %476 = vmatpush.msra.mxu0 0.0
        %477 = vmatpush.msra.mxu0 0.0
        %478 = vmatpush.msra.mxu0 0.0
        %479 = vmatpush.msra.mxu0 0.0
        %480 = vmatpush.msra.mxu0 0.0
        %481 = vmatpush.msra.mxu0 0.0
        %482 = vmatpush.msra.mxu0 %v235
        %483 = vmatpush.msra.mxu0 %v234
        %484 = vmatmul.f32.gmra.mxu0 %v446
        %v485 = vpop.f32.mrf.mxu0
        %v486 = vadd.f32 0.0, %v485
        %487 = vdwg.mxu0
        %v488 = vmax.f32 %v466, %v486
        %489 = vmatpush.msra.mxu0 0.0
        %490 = vmatpush.msra.mxu0 0.0
        %491 = vmatpush.msra.mxu0 0.0
        %492 = vmatpush.msra.mxu0 0.0
        %493 = vmatpush.msra.mxu0 0.0
        %494 = vmatpush.msra.mxu0 0.0
        %495 = vmatpush.msra.mxu0 0.0
        %496 = vmatpush.msra.mxu0 0.0
        %497 = vmatpush.msra.mxu0 0.0
        %498 = vmatpush.msra.mxu0 0.0
        %499 = vmatpush.msra.mxu0 0.0
        %500 = vmatpush.msra.mxu0 0.0
        %501 = vmatpush.msra.mxu0 0.0
        %502 = vmatpush.msra.mxu0 0.0
        %503 = vmatpush.msra.mxu0 %v237
        %504 = vmatpush.msra.mxu0 %v236
        %505 = vmatmul.f32.gmra.mxu0 %v446
        %v506 = vpop.f32.mrf.mxu0
        %v507 = vadd.f32 0.0, %v506
        %508 = vdwg.mxu0
        %v509 = vmax.f32 %v488, %v507
        %510 = vmatpush.msra.mxu0 0.0
        %511 = vmatpush.msra.mxu0 0.0
        %512 = vmatpush.msra.mxu0 0.0
        %513 = vmatpush.msra.mxu0 0.0
        %514 = vmatpush.msra.mxu0 0.0
        %515 = vmatpush.msra.mxu0 0.0
        %516 = vmatpush.msra.mxu0 0.0
        %517 = vmatpush.msra.mxu0 0.0
        %518 = vmatpush.msra.mxu0 0.0
        %519 = vmatpush.msra.mxu0 0.0
        %520 = vmatpush.msra.mxu0 0.0
        %521 = vmatpush.msra.mxu0 0.0
        %522 = vmatpush.msra.mxu0 0.0
        %523 = vmatpush.msra.mxu0 0.0
        %524 = vmatpush.msra.mxu0 %v243
        %525 = vmatpush.msra.mxu0 %v242
        %526 = vmatmul.f32.gmra.mxu0 %v248
        %v527 = vpop.f32.mrf.mxu0
        %v528 = vadd.f32 0.0, %v527
        %529 = vdwg.mxu0
        %530 = vmatpush.msra.mxu0 0.0
        %531 = vmatpush.msra.mxu0 0.0
        %532 = vmatpush.msra.mxu0 0.0
        %533 = vmatpush.msra.mxu0 0.0
        %534 = vmatpush.msra.mxu0 0.0
        %535 = vmatpush.msra.mxu0 0.0
        %536 = vmatpush.msra.mxu0 0.0
        %537 = vmatpush.msra.mxu0 0.0
        %538 = vmatpush.msra.mxu0 0.0
        %539 = vmatpush.msra.mxu0 0.0
        %540 = vmatpush.msra.mxu0 0.0
        %541 = vmatpush.msra.mxu0 0.0
        %542 = vmatpush.msra.mxu0 0.0
        %543 = vmatpush.msra.mxu0 0.0
        %544 = vmatpush.msra.mxu0 %v243
        %545 = vmatpush.msra.mxu0 %v242
        %546 = vmatmul.f32.gmra.mxu0 %v271
        %v547 = vpop.f32.mrf.mxu0
        %v548 = vadd.f32 0.0, %v547
        %549 = vdwg.mxu0
        %v550 = vmax.f32 %v528, %v548
        %551 = vmatpush.msra.mxu0 0.0
        %552 = vmatpush.msra.mxu0 0.0
        %553 = vmatpush.msra.mxu0 0.0
        %554 = vmatpush.msra.mxu0 0.0
        %555 = vmatpush.msra.mxu0 0.0
        %556 = vmatpush.msra.mxu0 0.0
        %557 = vmatpush.msra.mxu0 0.0
        %558 = vmatpush.msra.mxu0 0.0
        %559 = vmatpush.msra.mxu0 0.0
        %560 = vmatpush.msra.mxu0 0.0
        %561 = vmatpush.msra.mxu0 0.0
        %562 = vmatpush.msra.mxu0 0.0
        %563 = vmatpush.msra.mxu0 0.0
        %564 = vmatpush.msra.mxu0 0.0
        %565 = vmatpush.msra.mxu0 %v243
        %566 = vmatpush.msra.mxu0 %v242
        %567 = vmatmul.f32.gmra.mxu0 %v295
        %v568 = vpop.f32.mrf.mxu0
        %v569 = vadd.f32 0.0, %v568
        %570 = vdwg.mxu0
        %v571 = vmax.f32 %v550, %v569
        %v573 = vsel %vm246, %v571, 0
        %575 = vmatpush.msra.mxu0 0.0
        %576 = vmatpush.msra.mxu0 0.0
        %577 = vmatpush.msra.mxu0 0.0
        %578 = vmatpush.msra.mxu0 0.0
        %579 = vmatpush.msra.mxu0 0.0
        %580 = vmatpush.msra.mxu0 0.0
        %581 = vmatpush.msra.mxu0 0.0
        %582 = vmatpush.msra.mxu0 0.0
        %583 = vmatpush.msra.mxu0 0.0
        %584 = vmatpush.msra.mxu0 0.0
        %585 = vmatpush.msra.mxu0 0.0
        %586 = vmatpush.msra.mxu0 0.0
        %587 = vmatpush.msra.mxu0 0.0
        %588 = vmatpush.msra.mxu0 0.0
        %589 = vmatpush.msra.mxu0 %v233
        %590 = vmatpush.msra.mxu0 %v232
        %591 = vmatmul.f32.gmra.mxu0 %v573
        %v592 = vpop.f32.mrf.mxu0
        %v593 = vadd.f32 0.0, %v592
        %594 = vdwg.mxu0
        %595 = vmatpush.msra.mxu0 0.0
        %596 = vmatpush.msra.mxu0 0.0
        %597 = vmatpush.msra.mxu0 0.0
        %598 = vmatpush.msra.mxu0 0.0
        %599 = vmatpush.msra.mxu0 0.0
        %600 = vmatpush.msra.mxu0 0.0
        %601 = vmatpush.msra.mxu0 0.0
        %602 = vmatpush.msra.mxu0 0.0
        %603 = vmatpush.msra.mxu0 0.0
        %604 = vmatpush.msra.mxu0 0.0
        %605 = vmatpush.msra.mxu0 0.0
        %606 = vmatpush.msra.mxu0 0.0
        %607 = vmatpush.msra.mxu0 0.0
        %608 = vmatpush.msra.mxu0 0.0
        %609 = vmatpush.msra.mxu0 %v235
        %610 = vmatpush.msra.mxu0 %v234
        %611 = vmatmul.f32.gmra.mxu0 %v573
        %v612 = vpop.f32.mrf.mxu0
        %v613 = vadd.f32 0.0, %v612
        %614 = vdwg.mxu0
        %v615 = vmax.f32 %v593, %v613
        %616 = vmatpush.msra.mxu0 0.0
        %617 = vmatpush.msra.mxu0 0.0
        %618 = vmatpush.msra.mxu0 0.0
        %619 = vmatpush.msra.mxu0 0.0
        %620 = vmatpush.msra.mxu0 0.0
        %621 = vmatpush.msra.mxu0 0.0
        %622 = vmatpush.msra.mxu0 0.0
        %623 = vmatpush.msra.mxu0 0.0
        %624 = vmatpush.msra.mxu0 0.0
        %625 = vmatpush.msra.mxu0 0.0
        %626 = vmatpush.msra.mxu0 0.0
        %627 = vmatpush.msra.mxu0 0.0
        %628 = vmatpush.msra.mxu0 0.0
        %629 = vmatpush.msra.mxu0 0.0
        %630 = vmatpush.msra.mxu0 %v237
        %631 = vmatpush.msra.mxu0 %v236
        %632 = vmatmul.f32.gmra.mxu0 %v573
        %v633 = vpop.f32.mrf.mxu0
        %v634 = vadd.f32 0.0, %v633
        %635 = vdwg.mxu0
        %v636 = vmax.f32 %v615, %v634
        %637 = vmatpush.msra.mxu0 0.0
        %638 = vmatpush.msra.mxu0 0.0
        %639 = vmatpush.msra.mxu0 0.0
        %640 = vmatpush.msra.mxu0 0.0
        %641 = vmatpush.msra.mxu0 0.0
        %642 = vmatpush.msra.mxu0 0.0
        %643 = vmatpush.msra.mxu0 0.0
        %644 = vmatpush.msra.mxu0 0.0
        %645 = vmatpush.msra.mxu0 0.0
        %646 = vmatpush.msra.mxu0 0.0
        %647 = vmatpush.msra.mxu0 0.0
        %648 = vmatpush.msra.mxu0 0.0
        %649 = vmatpush.msra.mxu0 0.0
        %650 = vmatpush.msra.mxu0 0.0
        %651 = vmatpush.msra.mxu0 %v245
        %652 = vmatpush.msra.mxu0 %v244
        %653 = vmatmul.f32.gmra.mxu0 %v248
        %v654 = vpop.f32.mrf.mxu0
        %v655 = vadd.f32 0.0, %v654
        %656 = vdwg.mxu0
        %657 = vmatpush.msra.mxu0 0.0
        %658 = vmatpush.msra.mxu0 0.0
        %659 = vmatpush.msra.mxu0 0.0
        %660 = vmatpush.msra.mxu0 0.0
        %661 = vmatpush.msra.mxu0 0.0
        %662 = vmatpush.msra.mxu0 0.0
        %663 = vmatpush.msra.mxu0 0.0
        %664 = vmatpush.msra.mxu0 0.0
        %665 = vmatpush.msra.mxu0 0.0
        %666 = vmatpush.msra.mxu0 0.0
        %667 = vmatpush.msra.mxu0 0.0
        %668 = vmatpush.msra.mxu0 0.0
        %669 = vmatpush.msra.mxu0 0.0
        %670 = vmatpush.msra.mxu0 0.0
        %671 = vmatpush.msra.mxu0 %v245
        %672 = vmatpush.msra.mxu0 %v244
        %673 = vmatmul.f32.gmra.mxu0 %v271
        %v674 = vpop.f32.mrf.mxu0
        %v675 = vadd.f32 0.0, %v674
        %676 = vdwg.mxu0
        %v677 = vmax.f32 %v655, %v675
        %678 = vmatpush.msra.mxu0 0.0
        %679 = vmatpush.msra.mxu0 0.0
        %680 = vmatpush.msra.mxu0 0.0
        %681 = vmatpush.msra.mxu0 0.0
        %682 = vmatpush.msra.mxu0 0.0
        %683 = vmatpush.msra.mxu0 0.0
        %684 = vmatpush.msra.mxu0 0.0
        %685 = vmatpush.msra.mxu0 0.0
        %686 = vmatpush.msra.mxu0 0.0
        %687 = vmatpush.msra.mxu0 0.0
        %688 = vmatpush.msra.mxu0 0.0
        %689 = vmatpush.msra.mxu0 0.0
        %690 = vmatpush.msra.mxu0 0.0
        %691 = vmatpush.msra.mxu0 0.0
        %692 = vmatpush.msra.mxu0 %v245
        %693 = vmatpush.msra.mxu0 %v244
        %694 = vmatmul.f32.gmra.mxu0 %v295
        %v695 = vpop.f32.mrf.mxu0
        %v696 = vadd.f32 0.0, %v695
        %697 = vdwg.mxu0
        %v698 = vmax.f32 %v677, %v696
        %v700 = vsel %vm246, %v698, 0
        %702 = vmatpush.msra.mxu0 0.0
        %703 = vmatpush.msra.mxu0 0.0
        %704 = vmatpush.msra.mxu0 0.0
        %705 = vmatpush.msra.mxu0 0.0
        %706 = vmatpush.msra.mxu0 0.0
        %707 = vmatpush.msra.mxu0 0.0
        %708 = vmatpush.msra.mxu0 0.0
        %709 = vmatpush.msra.mxu0 0.0
        %710 = vmatpush.msra.mxu0 0.0
        %711 = vmatpush.msra.mxu0 0.0
        %712 = vmatpush.msra.mxu0 0.0
        %713 = vmatpush.msra.mxu0 0.0
        %714 = vmatpush.msra.mxu0 0.0
        %715 = vmatpush.msra.mxu0 0.0
        %716 = vmatpush.msra.mxu0 %v233
        %717 = vmatpush.msra.mxu0 %v232
        %718 = vmatmul.f32.gmra.mxu0 %v700
        %v719 = vpop.f32.mrf.mxu0
        %v720 = vadd.f32 0.0, %v719
        %721 = vdwg.mxu0
        %722 = vmatpush.msra.mxu0 0.0
        %723 = vmatpush.msra.mxu0 0.0
        %724 = vmatpush.msra.mxu0 0.0
        %725 = vmatpush.msra.mxu0 0.0
        %726 = vmatpush.msra.mxu0 0.0
        %727 = vmatpush.msra.mxu0 0.0
        %728 = vmatpush.msra.mxu0 0.0
        %729 = vmatpush.msra.mxu0 0.0
        %730 = vmatpush.msra.mxu0 0.0
        %731 = vmatpush.msra.mxu0 0.0
        %732 = vmatpush.msra.mxu0 0.0
        %733 = vmatpush.msra.mxu0 0.0
        %734 = vmatpush.msra.mxu0 0.0
        %735 = vmatpush.msra.mxu0 0.0
        %736 = vmatpush.msra.mxu0 %v235
        %737 = vmatpush.msra.mxu0 %v234
        %738 = vmatmul.f32.gmra.mxu0 %v700
        %v739 = vpop.f32.mrf.mxu0
        %v740 = vadd.f32 0.0, %v739
        %741 = vdwg.mxu0
        %v742 = vmax.f32 %v720, %v740
        %743 = vmatpush.msra.mxu0 0.0
        %744 = vmatpush.msra.mxu0 0.0
        %745 = vmatpush.msra.mxu0 0.0
        %746 = vmatpush.msra.mxu0 0.0
        %747 = vmatpush.msra.mxu0 0.0
        %748 = vmatpush.msra.mxu0 0.0
        %749 = vmatpush.msra.mxu0 0.0
        %750 = vmatpush.msra.mxu0 0.0
        %751 = vmatpush.msra.mxu0 0.0
        %752 = vmatpush.msra.mxu0 0.0
        %753 = vmatpush.msra.mxu0 0.0
        %754 = vmatpush.msra.mxu0 0.0
        %755 = vmatpush.msra.mxu0 0.0
        %756 = vmatpush.msra.mxu0 0.0
        %757 = vmatpush.msra.mxu0 %v237
        %758 = vmatpush.msra.mxu0 %v236
        %759 = vmatmul.f32.gmra.mxu0 %v700
        %v760 = vpop.f32.mrf.mxu0
        %v761 = vadd.f32 0.0, %v760
        %762 = vdwg.mxu0
        %v763 = vmax.f32 %v742, %v761
        %vm764 = vcmask 36864
        %765 = vst.msk [vmem:[%s227] sm:$0x1f] %vm764, %v382
        %766 = vst.msk [vmem:[%s227 + $0x8] sm:$0x1f] %vm764, %v509
        %767 = vst.msk [vmem:[%s227 + $0x10] sm:$0x1f] %vm764, %v636
        %768 = vst.msk [vmem:[%s227 + $0x18] sm:$0x1f] %vm764, %v763
        %s769 = smul.u32 4, %s18
        %p770 = scmp.lt.s32.totalorder %s769, 7
        %s771 = scalar_select %p770, %s769, 7
        %s772 = smul.addr %s771, 8
        %s773 = scalar_lea.vmem %s3, %s772
        // Predicated region
        $region45: #{maxpool2d_pallas.1} parent=31 // pred_check
          %p774 = pneg %p104
        $region46: #{maxpool2d_pallas.1} parent=31 // pred_check_branch
          %776 = sbr.rel (%p774) target = $region48
        $region47: #{maxpool2d_pallas.1} parent=31 // pred_region
          %s777 = smul.u32 4, %s18
        $region48: #{maxpool2d_pallas.1} parent=31 // pred_fallthru
          _
      $region32: #{maxpool2d_pallas.1} parent=5 // pred_fallthru
        _
      %p778 = scmp.le.s32.totalorder 2, %s13
      // Predicated region
      $region49: #{maxpool2d_pallas.1} parent=5 // pred_check
        %p779 = pneg %p778
      $region50: #{maxpool2d_pallas.1} parent=5 // pred_check_branch
        %781 = sbr.rel (%p779) target = $region52
      $region51: #{maxpool2d_pallas.1} parent=5 // pred_region
        %s782 = ssub.s32 %s13, 2
        // Predicated region
        $region53: #{maxpool2d_pallas.1} parent=51 // pred_check
          %p783 = pneg %p110
        $region54: #{maxpool2d_pallas.1} parent=51 // pred_check_branch
          %785 = sbr.rel (%p783) target = $region56
        $region55: #{maxpool2d_pallas.1} parent=51 // pred_region
          %s786 = smul.u32 4, %s19
          %p787 = scmp.lt.s32.totalorder %s786, 7
          %s788 = scalar_select %p787, %s786, 7
          %s789 = smul.addr %s788, 8
          %s790 = scalar_lea.vmem %s3, %s789
        $region56: #{maxpool2d_pallas.1} parent=51 // pred_fallthru
          _
      $region52: #{maxpool2d_pallas.1} parent=5 // pred_fallthru
        _
    $region6: #{maxpool2d_pallas.1} parent=1 // loop_footer
      %s17 = sadd.s32 1, %s13
    $region7: #{maxpool2d_pallas.1} parent=1 // loop_footer_branch
      %12 = sbr.rel target = $region3
    $region8: #{maxpool2d_pallas.1} parent=1 // loop_exit
      _
    %791 = vsyncpa [#allocation3], 1
    %s792 = scalar_lea.sflag [#allocation3], 1
    %793 = vsyncpa %s792, 1
    %794 = vsyncpa [#allocation5], 1

</llo_original>
